<compile_context>
chip_gen: v7x
topology: tpu7x:2x2x1
jax: 0.10.0
libtpu: 0.0.40
codegen_flags: <defaults>
</compile_context>

<pallas_src>
import math

import jax
import jax.numpy as jnp
from jax.experimental import pallas as pl
from jax.experimental.pallas import tpu as pltpu

NUM_EDGES_W = 12236  # hard-coded constant from local_global_drug_loss_
LOG_2 = math.log(2.0)
HIDDEN = 32          # FF_hidden1 = FF_hidden2 = FF_output = 32


def make_infomax_kernel(num_drugs: int, d_global: int, d_local: int):
    """Bake shape-derived constants into the kernel body."""
    num_edges = float(NUM_EDGES_W + num_drugs)
    neg_denom = float(num_drugs * num_drugs - 2 * (NUM_EDGES_W + num_drugs))
    rcp_pos = 1.0 / num_edges
    rcp_neg = 1.0 / neg_denom
    H = HIDDEN

    def kernel(gemb_ref, lemb_ref, posmask_ref,
               gw_ref, lw_ref, bias_ref,
               loss_ref, lenc_ref,
               genc_ref):
        i = pl.program_id(0)

        def ff(x, w_ref, d, b_row0):
            # weight slab rows: [w1 (d) | ws (d) | w2 (H) | w3 (H)], all [*, H]
            w1 = w_ref[0:d, :]
            ws = w_ref[d:2 * d, :]
            w2 = w_ref[2 * d:2 * d + H, :]
            w3 = w_ref[2 * d + H:2 * d + 2 * H, :]
            b1 = bias_ref[b_row0 + 0:b_row0 + 1, :]
            b2 = bias_ref[b_row0 + 1:b_row0 + 2, :]
            b3 = bias_ref[b_row0 + 2:b_row0 + 3, :]
            bs = bias_ref[b_row0 + 3:b_row0 + 4, :]
            # block: Linear -> ReLU -> Linear -> ReLU -> Linear -> ReLU
            h = jnp.maximum(jnp.dot(x, w1, preferred_element_type=jnp.float32) + b1, 0.0)
            h = jnp.maximum(jnp.dot(h, w2, preferred_element_type=jnp.float32) + b2, 0.0)
            h = jnp.maximum(jnp.dot(h, w3, preferred_element_type=jnp.float32) + b3, 0.0)
            # shortcut: Linear
            sc = jnp.dot(x, ws, preferred_element_type=jnp.float32) + bs
            return h + sc

        # First grid step: compute the global encoder once, zero the accumulator.
        @pl.when(i == 0)
        def _():
            genc_ref[...] = ff(gemb_ref[...], gw_ref, d_global, 0)
            loss_ref[0, 0] = 0.0

        # FF_local forward for this row tile: block(x) + linear_shortcut(x)
        l_enc = ff(lemb_ref[...], lw_ref, d_local, 4)
        lenc_ref[...] = l_enc

        # res = l_enc @ g_enc.T without materializing the transpose
        res = jax.lax.dot_general(
            l_enc, genc_ref[...],
            dimension_numbers=(((1,), (1,)), ((), ())),
            preferred_element_type=jnp.float32)

        pos = posmask_ref[...]
        neg = 1.0 - pos

        # softplus(-res), computed once; valid because pos/neg masks are binary
        # and complementary (adj is 0/1 with zero diagonal).
        sp = jnp.maximum(-res, 0.0) + jnp.log(1.0 + jnp.exp(-jnp.abs(res)))

        pos_sum = jnp.sum(pos * (LOG_2 - sp))            # JSD positive expectation (unnormalized)
        neg_sum = jnp.sum(neg * (sp + res - LOG_2))      # JSD negative expectation (unnormalized)

        # loss = E_neg - E_pos  (PRIOR term is 0); divisions folded into reciprocals.
        loss_ref[0, 0] += neg_sum * rcp_neg - pos_sum * rcp_pos

    return kernel


def pack_ff_params(params):
    """(w1,b1,w2,b2,w3,b3,ws,bs) -> (row-stacked weight slab, [4,H] bias rows)."""
    w1, b1, w2, b2, w3, b3, ws, bs = params
    w_slab = jnp.concatenate([w1, ws, w2, w3], axis=0)   # [2*d + 2*H, H]
    b_rows = jnp.concatenate([b1, b2, b3, bs], axis=0)   # [4, H]
    return w_slab, b_rows


def gcn_infomax_forward(global_emb, loc_emb, adj, global_params, local_params):
    n, d_g = global_emb.shape
    _, d_l = loc_emb.shape
    H = HIDDEN

    gw_slab, g_bias = pack_ff_params(global_params)
    lw_slab, l_bias = pack_ff_params(local_params)
    bias_slab = jnp.concatenate([g_bias, l_bias], axis=0)   # [8, H] -> one sublane group

    # Precompute pos_mask host-side; adj must be binary with zero diagonal so the
    # fused single-softplus formulation inside the kernel is exact.
    pos_mask = adj + jnp.eye(n, dtype=adj.dtype)

    tm = n if n <= 256 else 256
    assert n % tm == 0, "TODO(synk): pad num_drugs to a multiple of the row tile"
    grid = (n // tm,)

    kernel = make_infomax_kernel(n, d_g, d_l)

    loss, l_enc = pl.pallas_call(
        kernel,
        out_shape=(jax.ShapeDtypeStruct((1, 1), jnp.float32),
                   jax.ShapeDtypeStruct((n, H), jnp.float32)),
        grid=grid,
        in_specs=[
            pl.BlockSpec(memory_space=pltpu.MemorySpace.VMEM),   # global_emb (resident)
            pl.BlockSpec((tm, d_l), lambda i: (i, 0)),           # loc_emb row tile
            pl.BlockSpec((tm, n), lambda i: (i, 0)),             # pos_mask row tile
            pl.BlockSpec(memory_space=pltpu.MemorySpace.VMEM),   # global FF weight slab
            pl.BlockSpec(memory_space=pltpu.MemorySpace.VMEM),   # local FF weight slab
            pl.BlockSpec(memory_space=pltpu.MemorySpace.VMEM),   # packed biases [8, H]
        ],
        out_specs=(
            pl.BlockSpec(memory_space=pltpu.MemorySpace.SMEM),   # scalar loss accumulator
            pl.BlockSpec((tm, H), lambda i: (i, 0)),             # l_enc = FF_local(loc_emb)
        ),
        scratch_shapes=[pltpu.VMEM((n, H), jnp.float32)],        # g_enc, computed on step 0
        compiler_params=pltpu.CompilerParams(
            dimension_semantics=("arbitrary",)),                 # loss accumulates across tiles
    )(global_emb, loc_emb, pos_mask, gw_slab, lw_slab, bias_slab)

    return loss[0, 0], l_enc


def reference_forward(global_emb, loc_emb, adj, global_params, local_params):
    """Pure-JAX reference reproducing the PyTorch semantics (for verification)."""
    def ff(x, p):
        w1, b1, w2, b2, w3, b3, ws, bs = p
        h = jax.nn.relu(x @ w1 + b1)
        h = jax.nn.relu(h @ w2 + b2)
        h = jax.nn.relu(h @ w3 + b3)
        return h + (x @ ws + bs)

    g_enc = ff(global_emb, global_params)
    l_enc = ff(loc_emb, local_params)

    n = global_emb.shape[0]
    pos_mask = jnp.eye(n, dtype=jnp.float32) + adj
    neg_mask = 1.0 - pos_mask
    res = l_enc @ g_enc.T
    num_edges = NUM_EDGES_W + n
    e_pos = jnp.sum(LOG_2 - jax.nn.softplus(-(res * pos_mask))) / num_edges
    q = res * neg_mask
    e_neg = jnp.sum(jax.nn.softplus(-q) + q - LOG_2) / (n * n - 2 * num_edges)
    return e_neg - e_pos, l_enc


def init_ff_params(key, input_dim, hidden=HIDDEN):
    """Deterministic synthetic init of an FF_{local,global} block; weights [in,out]."""
    ks = jax.random.split(key, 8)
    s = 0.2
    w1 = s * jax.random.normal(ks[0], (input_dim, hidden), jnp.float32)
    b1 = s * jax.random.normal(ks[1], (1, hidden), jnp.float32)
    w2 = s * jax.random.normal(ks[2], (hidden, hidden), jnp.float32)
    b2 = s * jax.random.normal(ks[3], (1, hidden), jnp.float32)
    w3 = s * jax.random.normal(ks[4], (hidden, hidden), jnp.float32)
    b3 = s * jax.random.normal(ks[5], (1, hidden), jnp.float32)
    ws = s * jax.random.normal(ks[6], (input_dim, hidden), jnp.float32)
    bs = s * jax.random.normal(ks[7], (1, hidden), jnp.float32)
    return (w1, b1, w2, b2, w3, b3, ws, bs)


if __name__ == "__main__":
    # Small shapes consistent with the module's forward:
    #   num_drugs = 8, embedding_dim = 16, features_dim = 16, FF hidden/out = 32
    num_drugs = 8
    embedding_dim = 16
    features_dim = 16

    key = jax.random.PRNGKey(0)
    k_g, k_l, k_adj, k_pg, k_pl = jax.random.split(key, 5)

    global_emb = jax.random.normal(k_g, (num_drugs, embedding_dim), jnp.float32)
    loc_emb = jax.random.normal(k_l, (num_drugs, features_dim), jnp.float32)

    # symmetric 0/1 adjacency with zero diagonal
    raw = (jax.random.uniform(k_adj, (num_drugs, num_drugs)) < 0.3).astype(jnp.float32)
    adj = jnp.triu(raw, k=1)
    adj = adj + adj.T

    global_params = init_ff_params(k_pg, embedding_dim)   # FF_global(embedding_dim)
    local_params = init_ff_params(k_pl, features_dim)     # FF_local(features_dim)

    loss, l_enc = gcn_infomax_forward(global_emb, loc_emb, adj, global_params, local_params)
    loss = jax.block_until_ready(loss)
    l_enc = jax.block_until_ready(l_enc)

    ref_loss, ref_lenc = reference_forward(global_emb, loc_emb, adj, global_params, local_params)

    assert jnp.allclose(l_enc, ref_lenc, rtol=1e-3, atol=1e-3), "FF_local output mismatch"
    assert jnp.allclose(loss, ref_loss, rtol=1e-5, atol=1e-5), (loss, ref_loss)

    print("KERNEL_OK")
</pallas_src>

<mosaic_0001>
module attributes {stable_mosaic.version = 11 : i64} {
  func.func @kernel(%arg0: i32, %arg1: memref<8x16xf32, #tpu.memory_space<vmem>>, %arg2: memref<8x16xf32, #tpu.memory_space<vmem>>, %arg3: memref<8x8xf32, #tpu.memory_space<vmem>>, %arg4: memref<96x32xf32, #tpu.memory_space<vmem>>, %arg5: memref<96x32xf32, #tpu.memory_space<vmem>>, %arg6: memref<8x32xf32, #tpu.memory_space<vmem>>, %arg7: memref<1x1xf32, #tpu.memory_space<smem>>, %arg8: memref<8x32xf32, #tpu.memory_space<vmem>>, %arg9: memref<8x32xf32, #tpu.memory_space<vmem>>) attributes {dimension_semantics = [#tpu.dimension_semantics<arbitrary>], iteration_bounds = array<i64: 1>, scalar_prefetch = 0 : i64, scratch_operands = 1 : i64, tpu.core_type = #tpu.core_type<tc>, window_params = [{pipeline_mode = #tpu.pipeline_mode<synchronous>, transform_indices = @transform_0, window_bounds = array<i64: 8, 16>}, {transform_indices = @transform_1, window_bounds = array<i64: 8, 16>}, {transform_indices = @transform_2, window_bounds = array<i64: 8, 8>}, {pipeline_mode = #tpu.pipeline_mode<synchronous>, transform_indices = @transform_3, window_bounds = array<i64: 96, 32>}, {pipeline_mode = #tpu.pipeline_mode<synchronous>, transform_indices = @transform_4, window_bounds = array<i64: 96, 32>}, {pipeline_mode = #tpu.pipeline_mode<synchronous>, transform_indices = @transform_5, window_bounds = array<i64: 8, 32>}, {transform_indices = @transform_6, window_bounds = array<i64: 1, 1>}, {transform_indices = @transform_7, window_bounds = array<i64: 8, 32>}]} {
    %c0_i32 = arith.constant 0 : i32
    %0 = arith.cmpi eq, %arg0, %c0_i32 : i32
    %1 = arith.extui %0 : i1 to i32
    %c0_i32_0 = arith.constant 0 : i32
    %2 = arith.cmpi ne, %1, %c0_i32_0 : i32
    scf.if %2 {
      %c0_39 = arith.constant 0 : index
      %c0_40 = arith.constant 0 : index
      %70 = vector.load %arg1[%c0_39, %c0_40] : memref<8x16xf32, #tpu.memory_space<vmem>>, vector<8x16xf32>
      %c0_41 = arith.constant 0 : index
      %c0_42 = arith.constant 0 : index
      %71 = vector.load %arg4[%c0_41, %c0_42] : memref<96x32xf32, #tpu.memory_space<vmem>>, vector<16x32xf32>
      %c16_43 = arith.constant 16 : index
      %c0_44 = arith.constant 0 : index
      %72 = vector.load %arg4[%c16_43, %c0_44] : memref<96x32xf32, #tpu.memory_space<vmem>>, vector<16x32xf32>
      %c32_45 = arith.constant 32 : index
      %c0_46 = arith.constant 0 : index
      %73 = vector.load %arg4[%c32_45, %c0_46] : memref<96x32xf32, #tpu.memory_space<vmem>>, vector<32x32xf32>
      %c64_47 = arith.constant 64 : index
      %c0_48 = arith.constant 0 : index
      %74 = vector.load %arg4[%c64_47, %c0_48] : memref<96x32xf32, #tpu.memory_space<vmem>>, vector<32x32xf32>
      %c0_49 = arith.constant 0 : index
      %c0_50 = arith.constant 0 : index
      %75 = vector.load %arg6[%c0_49, %c0_50] : memref<8x32xf32, #tpu.memory_space<vmem>>, vector<1x32xf32>
      %c1 = arith.constant 1 : index
      %c0_51 = arith.constant 0 : index
      %76 = vector.load %arg6[%c1, %c0_51] : memref<8x32xf32, #tpu.memory_space<vmem>>, vector<1x32xf32>
      %c2 = arith.constant 2 : index
      %c0_52 = arith.constant 0 : index
      %77 = vector.load %arg6[%c2, %c0_52] : memref<8x32xf32, #tpu.memory_space<vmem>>, vector<1x32xf32>
      %c3 = arith.constant 3 : index
      %c0_53 = arith.constant 0 : index
      %78 = vector.load %arg6[%c3, %c0_53] : memref<8x32xf32, #tpu.memory_space<vmem>>, vector<1x32xf32>
      %cst_54 = arith.constant dense<0.000000e+00> : vector<8x32xf32>
      %79 = tpu.matmul %70, %71, %cst_54 {dimension_numbers = #tpu.dot_dimension_numbers<[1], [0], [0], [1], [0, 0, 1, 1], [], []>} : vector<8x16xf32>, vector<16x32xf32>, vector<8x32xf32> -> vector<8x32xf32>
      %80 = vector.broadcast %75 : vector<1x32xf32> to vector<8x32xf32>
      %81 = arith.addf %79, %80 : vector<8x32xf32>
      %cst_55 = arith.constant 0.000000e+00 : f32
      %82 = vector.broadcast %cst_55 : f32 to vector<8x32xf32>
      %83 = arith.maximumf %81, %82 : vector<8x32xf32>
      %cst_56 = arith.constant dense<0.000000e+00> : vector<8x32xf32>
      %84 = tpu.matmul %83, %73, %cst_56 {dimension_numbers = #tpu.dot_dimension_numbers<[1], [0], [0], [1], [0, 0, 1, 1], [], []>} : vector<8x32xf32>, vector<32x32xf32>, vector<8x32xf32> -> vector<8x32xf32>
      %85 = vector.broadcast %76 : vector<1x32xf32> to vector<8x32xf32>
      %86 = arith.addf %84, %85 : vector<8x32xf32>
      %cst_57 = arith.constant 0.000000e+00 : f32
      %87 = vector.broadcast %cst_57 : f32 to vector<8x32xf32>
      %88 = arith.maximumf %86, %87 : vector<8x32xf32>
      %cst_58 = arith.constant dense<0.000000e+00> : vector<8x32xf32>
      %89 = tpu.matmul %88, %74, %cst_58 {dimension_numbers = #tpu.dot_dimension_numbers<[1], [0], [0], [1], [0, 0, 1, 1], [], []>} : vector<8x32xf32>, vector<32x32xf32>, vector<8x32xf32> -> vector<8x32xf32>
      %90 = vector.broadcast %77 : vector<1x32xf32> to vector<8x32xf32>
      %91 = arith.addf %89, %90 : vector<8x32xf32>
      %cst_59 = arith.constant 0.000000e+00 : f32
      %92 = vector.broadcast %cst_59 : f32 to vector<8x32xf32>
      %93 = arith.maximumf %91, %92 : vector<8x32xf32>
      %cst_60 = arith.constant dense<0.000000e+00> : vector<8x32xf32>
      %94 = tpu.matmul %70, %72, %cst_60 {dimension_numbers = #tpu.dot_dimension_numbers<[1], [0], [0], [1], [0, 0, 1, 1], [], []>} : vector<8x16xf32>, vector<16x32xf32>, vector<8x32xf32> -> vector<8x32xf32>
      %95 = vector.broadcast %78 : vector<1x32xf32> to vector<8x32xf32>
      %96 = arith.addf %94, %95 : vector<8x32xf32>
      %97 = arith.addf %93, %96 : vector<8x32xf32>
      %c0_61 = arith.constant 0 : index
      %c0_62 = arith.constant 0 : index
      %98 = vector.load %arg9[%c0_61, %c0_62] : memref<8x32xf32, #tpu.memory_space<vmem>>, vector<8x32xf32>
      tpu.vector_store %arg9[%c0_61, %c0_62], %97 {strides = array<i32>} : memref<8x32xf32, #tpu.memory_space<vmem>>, vector<8x32xf32>,
      %cst_63 = arith.constant 0.000000e+00 : f32
      %c0_64 = arith.constant 0 : index
      %c0_65 = arith.constant 0 : index
      %99 = memref.load %arg7[%c0_64, %c0_65] : memref<1x1xf32, #tpu.memory_space<smem>>
      memref.store %cst_63, %arg7[%c0_64, %c0_65] : memref<1x1xf32, #tpu.memory_space<smem>>
    } else {
    }
    %c0 = arith.constant 0 : index
    %c0_1 = arith.constant 0 : index
    %3 = vector.load %arg2[%c0, %c0_1] : memref<8x16xf32, #tpu.memory_space<vmem>>, vector<8x16xf32>
    %c0_2 = arith.constant 0 : index
    %c0_3 = arith.constant 0 : index
    %4 = vector.load %arg5[%c0_2, %c0_3] : memref<96x32xf32, #tpu.memory_space<vmem>>, vector<16x32xf32>
    %c16 = arith.constant 16 : index
    %c0_4 = arith.constant 0 : index
    %5 = vector.load %arg5[%c16, %c0_4] : memref<96x32xf32, #tpu.memory_space<vmem>>, vector<16x32xf32>
    %c32 = arith.constant 32 : index
    %c0_5 = arith.constant 0 : index
    %6 = vector.load %arg5[%c32, %c0_5] : memref<96x32xf32, #tpu.memory_space<vmem>>, vector<32x32xf32>
    %c64 = arith.constant 64 : index
    %c0_6 = arith.constant 0 : index
    %7 = vector.load %arg5[%c64, %c0_6] : memref<96x32xf32, #tpu.memory_space<vmem>>, vector<32x32xf32>
    %c4 = arith.constant 4 : index
    %c0_7 = arith.constant 0 : index
    %8 = vector.load %arg6[%c4, %c0_7] : memref<8x32xf32, #tpu.memory_space<vmem>>, vector<1x32xf32>
    %c5 = arith.constant 5 : index
    %c0_8 = arith.constant 0 : index
    %9 = vector.load %arg6[%c5, %c0_8] : memref<8x32xf32, #tpu.memory_space<vmem>>, vector<1x32xf32>
    %c6 = arith.constant 6 : index
    %c0_9 = arith.constant 0 : index
    %10 = vector.load %arg6[%c6, %c0_9] : memref<8x32xf32, #tpu.memory_space<vmem>>, vector<1x32xf32>
    %c7 = arith.constant 7 : index
    %c0_10 = arith.constant 0 : index
    %11 = vector.load %arg6[%c7, %c0_10] : memref<8x32xf32, #tpu.memory_space<vmem>>, vector<1x32xf32>
    %cst = arith.constant dense<0.000000e+00> : vector<8x32xf32>
    %12 = tpu.matmul %3, %4, %cst {dimension_numbers = #tpu.dot_dimension_numbers<[1], [0], [0], [1], [0, 0, 1, 1], [], []>} : vector<8x16xf32>, vector<16x32xf32>, vector<8x32xf32> -> vector<8x32xf32>
    %13 = vector.broadcast %8 : vector<1x32xf32> to vector<8x32xf32>
    %14 = arith.addf %12, %13 : vector<8x32xf32>
    %cst_11 = arith.constant 0.000000e+00 : f32
    %15 = vector.broadcast %cst_11 : f32 to vector<8x32xf32>
    %16 = arith.maximumf %14, %15 : vector<8x32xf32>
    %cst_12 = arith.constant dense<0.000000e+00> : vector<8x32xf32>
    %17 = tpu.matmul %16, %6, %cst_12 {dimension_numbers = #tpu.dot_dimension_numbers<[1], [0], [0], [1], [0, 0, 1, 1], [], []>} : vector<8x32xf32>, vector<32x32xf32>, vector<8x32xf32> -> vector<8x32xf32>
    %18 = vector.broadcast %9 : vector<1x32xf32> to vector<8x32xf32>
    %19 = arith.addf %17, %18 : vector<8x32xf32>
    %cst_13 = arith.constant 0.000000e+00 : f32
    %20 = vector.broadcast %cst_13 : f32 to vector<8x32xf32>
    %21 = arith.maximumf %19, %20 : vector<8x32xf32>
    %cst_14 = arith.constant dense<0.000000e+00> : vector<8x32xf32>
    %22 = tpu.matmul %21, %7, %cst_14 {dimension_numbers = #tpu.dot_dimension_numbers<[1], [0], [0], [1], [0, 0, 1, 1], [], []>} : vector<8x32xf32>, vector<32x32xf32>, vector<8x32xf32> -> vector<8x32xf32>
    %23 = vector.broadcast %10 : vector<1x32xf32> to vector<8x32xf32>
    %24 = arith.addf %22, %23 : vector<8x32xf32>
    %cst_15 = arith.constant 0.000000e+00 : f32
    %25 = vector.broadcast %cst_15 : f32 to vector<8x32xf32>
    %26 = arith.maximumf %24, %25 : vector<8x32xf32>
    %cst_16 = arith.constant dense<0.000000e+00> : vector<8x32xf32>
    %27 = tpu.matmul %3, %5, %cst_16 {dimension_numbers = #tpu.dot_dimension_numbers<[1], [0], [0], [1], [0, 0, 1, 1], [], []>} : vector<8x16xf32>, vector<16x32xf32>, vector<8x32xf32> -> vector<8x32xf32>
    %28 = vector.broadcast %11 : vector<1x32xf32> to vector<8x32xf32>
    %29 = arith.addf %27, %28 : vector<8x32xf32>
    %30 = arith.addf %26, %29 : vector<8x32xf32>
    %c0_17 = arith.constant 0 : index
    %c0_18 = arith.constant 0 : index
    %31 = vector.load %arg8[%c0_17, %c0_18] : memref<8x32xf32, #tpu.memory_space<vmem>>, vector<8x32xf32>
    tpu.vector_store %arg8[%c0_17, %c0_18], %30 {strides = array<i32>} : memref<8x32xf32, #tpu.memory_space<vmem>>, vector<8x32xf32>,
    %c0_19 = arith.constant 0 : index
    %c0_20 = arith.constant 0 : index
    %32 = vector.load %arg9[%c0_19, %c0_20] : memref<8x32xf32, #tpu.memory_space<vmem>>, vector<8x32xf32>
    %cst_21 = arith.constant dense<0.000000e+00> : vector<8x8xf32>
    %33 = tpu.matmul %30, %32, %cst_21 {dimension_numbers = #tpu.dot_dimension_numbers<[1], [1], [0], [0], [0, 0, 1, 0], [], []>} : vector<8x32xf32>, vector<8x32xf32>, vector<8x8xf32> -> vector<8x8xf32>
    %c0_22 = arith.constant 0 : index
    %c0_23 = arith.constant 0 : index
    %34 = vector.load %arg3[%c0_22, %c0_23] : memref<8x8xf32, #tpu.memory_space<vmem>>, vector<8x8xf32>
    %cst_24 = arith.constant 1.000000e+00 : f32
    %35 = vector.broadcast %cst_24 : f32 to vector<8x8xf32>
    %36 = arith.subf %35, %34 : vector<8x8xf32>
    %cst_25 = arith.constant 0.000000e+00 : f32
    %37 = vector.broadcast %cst_25 : f32 to vector<8x8xf32>
    %38 = arith.subf %37, %33 : vector<8x8xf32>
    %cst_26 = arith.constant 0.000000e+00 : f32
    %39 = vector.broadcast %cst_26 : f32 to vector<8x8xf32>
    %40 = arith.maximumf %38, %39 : vector<8x8xf32>
    %41 = math.absf %33 : vector<8x8xf32>
    %cst_27 = arith.constant 0.000000e+00 : f32
    %42 = vector.broadcast %cst_27 : f32 to vector<8x8xf32>
    %43 = arith.subf %42, %41 : vector<8x8xf32>
    %44 = math.exp %43 : vector<8x8xf32>
    %cst_28 = arith.constant 1.000000e+00 : f32
    %45 = vector.broadcast %cst_28 : f32 to vector<8x8xf32>
    %46 = arith.addf %45, %44 : vector<8x8xf32>
    %47 = math.log %46 : vector<8x8xf32>
    %48 = arith.addf %40, %47 : vector<8x8xf32>
    %cst_29 = arith.constant 0.693147182 : f32
    %49 = vector.broadcast %cst_29 : f32 to vector<8x8xf32>
    %50 = arith.subf %49, %48 : vector<8x8xf32>
    %51 = arith.mulf %34, %50 : vector<8x8xf32>
    %52 = vector.shape_cast %51 : vector<8x8xf32> to vector<1x8x8xf32>
    %cst_30 = arith.constant dense<0.000000e+00> : vector<1xf32>
    %53 = vector.multi_reduction <add>, %52, %cst_30 [1, 2] : vector<1x8x8xf32> to vector<1xf32>
    %54 = vector.shape_cast %53 : vector<1xf32> to vector<1x1x1xf32>
    %55 = vector.extract %54[0, 0, 0] : f32 from vector<1x1x1xf32>
    %56 = arith.addf %48, %33 : vector<8x8xf32>
    %cst_31 = arith.constant 0.693147182 : f32
    %57 = vector.broadcast %cst_31 : f32 to vector<8x8xf32>
    %58 = arith.subf %56, %57 : vector<8x8xf32>
    %59 = arith.mulf %36, %58 : vector<8x8xf32>
    %60 = vector.shape_cast %59 : vector<8x8xf32> to vector<1x8x8xf32>
    %cst_32 = arith.constant dense<0.000000e+00> : vector<1xf32>
    %61 = vector.multi_reduction <add>, %60, %cst_32 [1, 2] : vector<1x8x8xf32> to vector<1xf32>
    %62 = vector.shape_cast %61 : vector<1xf32> to vector<1x1x1xf32>
    %63 = vector.extract %62[0, 0, 0] : f32 from vector<1x1x1xf32>
    %c0_33 = arith.constant 0 : index
    %c0_34 = arith.constant 0 : index
    %64 = memref.load %arg7[%c0_33, %c0_34] : memref<1x1xf32, #tpu.memory_space<smem>>
    %cst_35 = arith.constant -4.09433342E-5 : f32
    %65 = arith.mulf %63, %cst_35 : f32
    %cst_36 = arith.constant 8.16726533E-5 : f32
    %66 = arith.mulf %55, %cst_36 : f32
    %67 = arith.subf %65, %66 : f32
    %68 = arith.addf %64, %67 : f32
    %c0_37 = arith.constant 0 : index
    %c0_38 = arith.constant 0 : index
    %69 = memref.load %arg7[%c0_37, %c0_38] : memref<1x1xf32, #tpu.memory_space<smem>>
    memref.store %68, %arg7[%c0_37, %c0_38] : memref<1x1xf32, #tpu.memory_space<smem>>
    return
  }
  func.func @transform_0(%arg0: i32) -> (i32, i32) {
    %c0_i32 = arith.constant 0 : i32
    %c0_i32_0 = arith.constant 0 : i32
    %c0_i32_1 = arith.constant 0 : i32
    return %c0_i32, %c0_i32_0 : i32, i32
  }
  func.func @transform_1(%arg0: i32) -> (i32, i32) {
    %c0_i32 = arith.constant 0 : i32
    %c0_i32_0 = arith.constant 0 : i32
    return %arg0, %c0_i32 : i32, i32
  }
  func.func @transform_2(%arg0: i32) -> (i32, i32) {
    %c0_i32 = arith.constant 0 : i32
    %c0_i32_0 = arith.constant 0 : i32
    return %arg0, %c0_i32 : i32, i32
  }
  func.func @transform_3(%arg0: i32) -> (i32, i32) {
    %c0_i32 = arith.constant 0 : i32
    %c0_i32_0 = arith.constant 0 : i32
    %c0_i32_1 = arith.constant 0 : i32
    return %c0_i32, %c0_i32_0 : i32, i32
  }
  func.func @transform_4(%arg0: i32) -> (i32, i32) {
    %c0_i32 = arith.constant 0 : i32
    %c0_i32_0 = arith.constant 0 : i32
    %c0_i32_1 = arith.constant 0 : i32
    return %c0_i32, %c0_i32_0 : i32, i32
  }
  func.func @transform_5(%arg0: i32) -> (i32, i32) {
    %c0_i32 = arith.constant 0 : i32
    %c0_i32_0 = arith.constant 0 : i32
    %c0_i32_1 = arith.constant 0 : i32
    return %c0_i32, %c0_i32_0 : i32, i32
  }
  func.func @transform_6(%arg0: i32) -> (i32, i32) {
    %c0_i32 = arith.constant 0 : i32
    %c0_i32_0 = arith.constant 0 : i32
    %c0_i32_1 = arith.constant 0 : i32
    return %c0_i32, %c0_i32_0 : i32, i32
  }
  func.func @transform_7(%arg0: i32) -> (i32, i32) {
    %c0_i32 = arith.constant 0 : i32
    %c0_i32_0 = arith.constant 0 : i32
    return %arg0, %c0_i32 : i32, i32
  }
}

</mosaic_0001>

<llo_original>
// kernel: tpu_custom_call.1
$region0: #{tpu_custom_call.1}
  #allocation0 [shape = 'u32[]', space=smem, size = 0x4, offset = 0x4, fixed_abs, tag = 'smem constant byte address 0x4 - core index']
  #allocation1 [shape = 'u32[144,128]{1,0:T(1,128)}', space=vmem, size = 0x12000, scoped, tag = 'internal scratch']
  #allocation2 [shape = 'f32[8,32]{1,0:T(8,128)}', space=vmem, size = 0x1000, scoped, tag = 'scratch operand']
  %s0 = inlined_call_operand.vmem [shape: f32[8,16], index: 0, kind: input, shape index: {}]
  %s1 = inlined_call_operand.vmem [shape: f32[8,16], index: 1, kind: input, shape index: {}]
  %s2 = inlined_call_operand.vmem [shape: f32[8,8], index: 2, kind: input, shape index: {}]
  %s3 = inlined_call_operand.vmem [shape: f32[96,32], index: 3, kind: input, shape index: {}]
  %s4 = inlined_call_operand.vmem [shape: f32[96,32], index: 4, kind: input, shape index: {}]
  %s5 = inlined_call_operand.vmem [shape: f32[8,32], index: 5, kind: input, shape index: {}]
  %s6 = inlined_call_operand.hbm [shape: f32[1,1], index: 6, kind: output, shape index: {0}]
  %s7 = inlined_call_operand.hbm [shape: f32[8,32], index: 7, kind: output, shape index: {1}]
  %8 = xla_tuple %s6, %s7
  %s9 = sld [smem:[#allocation0]]
  $region46: #{tpu_custom_call.1} parent=0
    _
  %s11 = ssub.s32 1, %s9
  %s12 = scalar_select 0, %s11, %s9
  $region1: #{tpu_custom_call.1} parent=0
    #allocation3 [shape = 'u8[512]{0}', space=smem, size = 0x200, scoped, tag = 'output window, operand 0, single buffered']
    #allocation4 [shape = 's32[1]{0}', space=sflag, size = 0x4, scoped, tag = 'scoped memory for tpu_custom_call.1']
    #allocation5 [shape = 's32[1]{0}', space=sflag, size = 0x4, scoped, tag = 'scoped memory for tpu_custom_call.1']
    #allocation6 [shape = 'u8[4096]{0}', space=vmem, size = 0x1000, scoped, tag = 'output window, operand 1, single buffered']
    %13 = vsyncpa [#allocation5], 0
    %14 = vsyncpa [#allocation4], 0
    // Predicated region
    $region2: #{tpu_custom_call.1} parent=1 // pred_check
      _
    $region3: #{tpu_custom_call.1} parent=1 // pred_check_branch
      %16 = sbr.rel (0) target = $region5
    $region4: #{tpu_custom_call.1} parent=1 // pred_region
      _
    $region5: #{tpu_custom_call.1} parent=1 // pred_fallthru
      _
    // Predicated region
    $region6: #{tpu_custom_call.1} parent=1 // pred_check
      _
    $region7: #{tpu_custom_call.1} parent=1 // pred_check_branch
      %18 = sbr.rel (0) target = $region9
    $region8: #{tpu_custom_call.1} parent=1 // pred_region
      _
    $region9: #{tpu_custom_call.1} parent=1 // pred_fallthru
      _
    // Predicated region
    $region10: #{tpu_custom_call.1} parent=1 // pred_check
      _
    $region11: #{tpu_custom_call.1} parent=1 // pred_check_branch
      %20 = sbr.rel (0) target = $region13
    $region12: #{tpu_custom_call.1} parent=1 // pred_region
      _
    $region13: #{tpu_custom_call.1} parent=1 // pred_fallthru
      _
    // Predicated region
    $region14: #{tpu_custom_call.1} parent=1 // pred_check
      _
    $region15: #{tpu_custom_call.1} parent=1 // pred_check_branch
      %22 = sbr.rel (0) target = $region17
    $region16: #{tpu_custom_call.1} parent=1 // pred_region
      _
    $region17: #{tpu_custom_call.1} parent=1 // pred_fallthru
      _
    // Predicated region
    $region18: #{tpu_custom_call.1} parent=1 // pred_check
      _
    $region19: #{tpu_custom_call.1} parent=1 // pred_check_branch
      %24 = sbr.rel (0) target = $region21
    $region20: #{tpu_custom_call.1} parent=1 // pred_region
      _
    $region21: #{tpu_custom_call.1} parent=1 // pred_fallthru
      _
    // Predicated region
    $region22: #{tpu_custom_call.1} parent=1 // pred_check
      _
    $region23: #{tpu_custom_call.1} parent=1 // pred_check_branch
      %26 = sbr.rel (0) target = $region25
    $region24: #{tpu_custom_call.1} parent=1 // pred_region
      _
    $region25: #{tpu_custom_call.1} parent=1 // pred_fallthru
      _
    %p27 = scmp.eq.s32.totalorder 0, 0
    // Predicated region
    $region26: #{tpu_custom_call.1} parent=1 // pred_check
      %p28 = pneg %p27
    $region27: #{tpu_custom_call.1} parent=1 // pred_check_branch
      %30 = sbr.rel (%p28) target = $region29
    $region28: #{tpu_custom_call.1} parent=1 // pred_region
      %v31 = vld [vmem:[%s0] sm:$0xff]
      %v32 = vld [vmem:[%s3] sm:$0xff]
      %v33 = vld [vmem:[%s3 + $0x8] sm:$0xff]
      %v34 = vld [vmem:[%s3 + $0x10] sm:$0xff]
      %v35 = vld [vmem:[%s3 + $0x18] sm:$0xff]
      %v36 = vld [vmem:[%s3 + $0x20] sm:$0xff]
      %v37 = vld [vmem:[%s3 + $0x28] sm:$0xff]
      %v38 = vld [vmem:[%s3 + $0x30] sm:$0xff]
      %v39 = vld [vmem:[%s3 + $0x38] sm:$0xff]
      %v40 = vld [vmem:[%s3 + $0x40] sm:$0xff]
      %v41 = vld [vmem:[%s3 + $0x48] sm:$0xff]
      %v42 = vld [vmem:[%s3 + $0x50] sm:$0xff]
      %v43 = vld [vmem:[%s3 + $0x58] sm:$0xff]
      %v44 = vld [vmem:[%s5] sm:$0x1]
      %v45 = vld [vmem:[%s5 + $0x1] sm:$0x1]
      %v46 = vld [vmem:[%s5 + $0x2] sm:$0x1]
      %v47 = vld [vmem:[%s5 + $0x3] sm:$0x1]
      %v48 = vlaneseq
      %v49 = vshrl.u32 %v48, 7
      %v50 = vsub.s32 0, %v49
      %v51 = vrot.slane %v44, %v50
      %vm52 = vcmask 130048
      %v54 = vsel %vm52, %v31, 0
      %56 = vmatprep.subr.mxu0 0.0
      %57 = vmatpush1.msra.mxu0 %v32
      %58 = vmatprep.subr.mxu0 0.0
      %59 = vmatpush1.msra.mxu0 %v33
      %60 = vmatprep.subr.mxu0 0.0
      %61 = vmatpush1.msra.mxu0 0.0
      %62 = vmatprep.subr.mxu0 0.0
      %63 = vmatpush1.msra.mxu0 0.0
      %64 = vmatprep.subr.mxu0 0.0
      %65 = vmatpush1.msra.mxu0 0.0
      %66 = vmatprep.subr.mxu0 0.0
      %67 = vmatpush1.msra.mxu0 0.0
      %68 = vmatprep.subr.mxu0 0.0
      %69 = vmatpush1.msra.mxu0 0.0
      %70 = vmatprep.subr.mxu0 0.0
      %71 = vmatpush1.msra.mxu0 0.0
      %72 = vmatprep.subr.mxu0 0.0
      %73 = vmatpush1.msra.mxu0 0.0
      %74 = vmatprep.subr.mxu0 0.0
      %75 = vmatpush1.msra.mxu0 0.0
      %76 = vmatprep.subr.mxu0 0.0
      %77 = vmatpush1.msra.mxu0 0.0
      %78 = vmatprep.subr.mxu0 0.0
      %79 = vmatpush1.msra.mxu0 0.0
      %80 = vmatprep.subr.mxu0 0.0
      %81 = vmatpush1.msra.mxu0 0.0
      %82 = vmatprep.subr.mxu0 0.0
      %83 = vmatpush1.msra.mxu0 0.0
      %84 = vmatprep.subr.mxu0 0.0
      %85 = vmatpush1.msra.mxu0 0.0
      %86 = vmatprep.subr.mxu0 0.0
      %87 = vmatpush1.msra.mxu0 0.0
      %88 = vmatprep.subr.mxu0 0.0
      %89 = vmatpush1.msra.mxu0 0.0
      %90 = vmatprep.subr.mxu0 0.0
      %91 = vmatpush1.msra.mxu0 0.0
      %92 = vmatprep.subr.mxu0 0.0
      %93 = vmatpush1.msra.mxu0 0.0
      %94 = vmatprep.subr.mxu0 0.0
      %95 = vmatpush1.msra.mxu0 0.0
      %96 = vmatprep.subr.mxu0 0.0
      %97 = vmatpush1.msra.mxu0 0.0
      %98 = vmatprep.subr.mxu0 0.0
      %99 = vmatpush1.msra.mxu0 0.0
      %100 = vmatprep.subr.mxu0 0.0
      %101 = vmatpush1.msra.mxu0 0.0
      %102 = vmatprep.subr.mxu0 0.0
      %103 = vmatpush1.msra.mxu0 0.0
      %104 = vmatprep.subr.mxu0 0.0
      %105 = vmatpush1.msra.mxu0 0.0
      %106 = vmatprep.subr.mxu0 0.0
      %107 = vmatpush1.msra.mxu0 0.0
      %108 = vmatprep.subr.mxu0 0.0
      %109 = vmatpush1.msra.mxu0 0.0
      %110 = vmatprep.subr.mxu0 0.0
      %111 = vmatpush1.msra.mxu0 0.0
      %112 = vmatprep.subr.mxu0 0.0
      %113 = vmatpush1.msra.mxu0 0.0
      %114 = vmatprep.subr.mxu0 0.0
      %115 = vmatpush1.msra.mxu0 0.0
      %116 = vmatprep.subr.mxu0 0.0
      %117 = vmatpush1.msra.mxu0 0.0
      %118 = vmatprep.subr.mxu0 0.0
      %119 = vmatpush1.msra.mxu0 0.0
      %120 = vmatprep.mubr.f32.mxu0 0.0
      %121 = vmatmul.mubr.f32.gmra.mrb[0].mxu0 %v54
      %v122 = vpop.f32.mrb[0].mxu0
      %v123 = vadd.f32 %v51, %v122
      %v124 = vpop.f32.mrb[0].mxu0
      %125 = vdwg.mxu0
      %v126 = vmax.f32 %v123, 0.0
      %v127 = vlaneseq
      %v128 = vshrl.u32 %v127, 7
      %v129 = vsub.s32 0, %v128
      %v130 = vrot.slane %v45, %v129
      %vm131 = vcmask 261120
      %v133 = vsel %vm131, %v126, 0
      %135 = vmatprep.subr.mxu0 0.0
      %136 = vmatpush1.msra.mxu0 %v36
      %137 = vmatprep.subr.mxu0 0.0
      %138 = vmatpush1.msra.mxu0 %v37
      %139 = vmatprep.subr.mxu0 0.0
      %140 = vmatpush1.msra.mxu0 %v38
      %141 = vmatprep.subr.mxu0 0.0
      %142 = vmatpush1.msra.mxu0 %v39
      %143 = vmatprep.subr.mxu0 0.0
      %144 = vmatpush1.msra.mxu0 0.0
      %145 = vmatprep.subr.mxu0 0.0
      %146 = vmatpush1.msra.mxu0 0.0
      %147 = vmatprep.subr.mxu0 0.0
      %148 = vmatpush1.msra.mxu0 0.0
      %149 = vmatprep.subr.mxu0 0.0
      %150 = vmatpush1.msra.mxu0 0.0
      %151 = vmatprep.subr.mxu0 0.0
      %152 = vmatpush1.msra.mxu0 0.0
      %153 = vmatprep.subr.mxu0 0.0
      %154 = vmatpush1.msra.mxu0 0.0
      %155 = vmatprep.subr.mxu0 0.0
      %156 = vmatpush1.msra.mxu0 0.0
      %157 = vmatprep.subr.mxu0 0.0
      %158 = vmatpush1.msra.mxu0 0.0
      %159 = vmatprep.subr.mxu0 0.0
      %160 = vmatpush1.msra.mxu0 0.0
      %161 = vmatprep.subr.mxu0 0.0
      %162 = vmatpush1.msra.mxu0 0.0
      %163 = vmatprep.subr.mxu0 0.0
      %164 = vmatpush1.msra.mxu0 0.0
      %165 = vmatprep.subr.mxu0 0.0
      %166 = vmatpush1.msra.mxu0 0.0
      %167 = vmatprep.subr.mxu0 0.0
      %168 = vmatpush1.msra.mxu0 0.0
      %169 = vmatprep.subr.mxu0 0.0
      %170 = vmatpush1.msra.mxu0 0.0
      %171 = vmatprep.subr.mxu0 0.0
      %172 = vmatpush1.msra.mxu0 0.0
      %173 = vmatprep.subr.mxu0 0.0
      %174 = vmatpush1.msra.mxu0 0.0
      %175 = vmatprep.subr.mxu0 0.0
      %176 = vmatpush1.msra.mxu0 0.0
      %177 = vmatprep.subr.mxu0 0.0
      %178 = vmatpush1.msra.mxu0 0.0
      %179 = vmatprep.subr.mxu0 0.0
      %180 = vmatpush1.msra.mxu0 0.0
      %181 = vmatprep.subr.mxu0 0.0
      %182 = vmatpush1.msra.mxu0 0.0
      %183 = vmatprep.subr.mxu0 0.0
      %184 = vmatpush1.msra.mxu0 0.0
      %185 = vmatprep.subr.mxu0 0.0
      %186 = vmatpush1.msra.mxu0 0.0
      %187 = vmatprep.subr.mxu0 0.0
      %188 = vmatpush1.msra.mxu0 0.0
      %189 = vmatprep.subr.mxu0 0.0
      %190 = vmatpush1.msra.mxu0 0.0
      %191 = vmatprep.subr.mxu0 0.0
      %192 = vmatpush1.msra.mxu0 0.0
      %193 = vmatprep.subr.mxu0 0.0
      %194 = vmatpush1.msra.mxu0 0.0
      %195 = vmatprep.subr.mxu0 0.0
      %196 = vmatpush1.msra.mxu0 0.0
      %197 = vmatprep.subr.mxu0 0.0
      %198 = vmatpush1.msra.mxu0 0.0
      %199 = vmatprep.mubr.f32.mxu0 0.0
      %200 = vmatmul.mubr.f32.gmra.mrb[0].mxu0 %v133
      %v201 = vpop.f32.mrb[0].mxu0
      %v202 = vadd.f32 %v130, %v201
      %v203 = vpop.f32.mrb[0].mxu0
      %204 = vdwg.mxu0
      %v205 = vmax.f32 %v202, 0.0
      %v206 = vlaneseq
      %v207 = vshrl.u32 %v206, 7
      %v208 = vsub.s32 0, %v207
      %v209 = vrot.slane %v46, %v208
      %v211 = vsel %vm131, %v205, 0
      %213 = vmatprep.subr.mxu0 0.0
      %214 = vmatpush1.msra.mxu0 %v40
      %215 = vmatprep.subr.mxu0 0.0
      %216 = vmatpush1.msra.mxu0 %v41
      %217 = vmatprep.subr.mxu0 0.0
      %218 = vmatpush1.msra.mxu0 %v42
      %219 = vmatprep.subr.mxu0 0.0
      %220 = vmatpush1.msra.mxu0 %v43
      %221 = vmatprep.subr.mxu0 0.0
      %222 = vmatpush1.msra.mxu0 0.0
      %223 = vmatprep.subr.mxu0 0.0
      %224 = vmatpush1.msra.mxu0 0.0
      %225 = vmatprep.subr.mxu0 0.0
      %226 = vmatpush1.msra.mxu0 0.0
      %227 = vmatprep.subr.mxu0 0.0
      %228 = vmatpush1.msra.mxu0 0.0
      %229 = vmatprep.subr.mxu0 0.0
      %230 = vmatpush1.msra.mxu0 0.0
      %231 = vmatprep.subr.mxu0 0.0
      %232 = vmatpush1.msra.mxu0 0.0
      %233 = vmatprep.subr.mxu0 0.0
      %234 = vmatpush1.msra.mxu0 0.0
      %235 = vmatprep.subr.mxu0 0.0
      %236 = vmatpush1.msra.mxu0 0.0
      %237 = vmatprep.subr.mxu0 0.0
      %238 = vmatpush1.msra.mxu0 0.0
      %239 = vmatprep.subr.mxu0 0.0
      %240 = vmatpush1.msra.mxu0 0.0
      %241 = vmatprep.subr.mxu0 0.0
      %242 = vmatpush1.msra.mxu0 0.0
      %243 = vmatprep.subr.mxu0 0.0
      %244 = vmatpush1.msra.mxu0 0.0
      %245 = vmatprep.subr.mxu0 0.0
      %246 = vmatpush1.msra.mxu0 0.0
      %247 = vmatprep.subr.mxu0 0.0
      %248 = vmatpush1.msra.mxu0 0.0
      %249 = vmatprep.subr.mxu0 0.0
      %250 = vmatpush1.msra.mxu0 0.0
      %251 = vmatprep.subr.mxu0 0.0
      %252 = vmatpush1.msra.mxu0 0.0
      %253 = vmatprep.subr.mxu0 0.0
      %254 = vmatpush1.msra.mxu0 0.0
      %255 = vmatprep.subr.mxu0 0.0
      %256 = vmatpush1.msra.mxu0 0.0
      %257 = vmatprep.subr.mxu0 0.0
      %258 = vmatpush1.msra.mxu0 0.0
      %259 = vmatprep.subr.mxu0 0.0
      %260 = vmatpush1.msra.mxu0 0.0
      %261 = vmatprep.subr.mxu0 0.0
      %262 = vmatpush1.msra.mxu0 0.0
      %263 = vmatprep.subr.mxu0 0.0
      %264 = vmatpush1.msra.mxu0 0.0
      %265 = vmatprep.subr.mxu0 0.0
      %266 = vmatpush1.msra.mxu0 0.0
      %267 = vmatprep.subr.mxu0 0.0
      %268 = vmatpush1.msra.mxu0 0.0
      %269 = vmatprep.subr.mxu0 0.0
      %270 = vmatpush1.msra.mxu0 0.0
      %271 = vmatprep.subr.mxu0 0.0
      %272 = vmatpush1.msra.mxu0 0.0
      %273 = vmatprep.subr.mxu0 0.0
      %274 = vmatpush1.msra.mxu0 0.0
      %275 = vmatprep.subr.mxu0 0.0
      %276 = vmatpush1.msra.mxu0 0.0
      %277 = vmatprep.mubr.f32.mxu0 0.0
      %278 = vmatmul.mubr.f32.gmra.mrb[0].mxu0 %v211
      %v279 = vpop.f32.mrb[0].mxu0
      %v280 = vadd.f32 %v209, %v279
      %v281 = vpop.f32.mrb[0].mxu0
      %282 = vdwg.mxu0
      %v283 = vmax.f32 %v280, 0.0
      %v284 = vlaneseq
      %v285 = vshrl.u32 %v284, 7
      %v286 = vsub.s32 0, %v285
      %v287 = vrot.slane %v47, %v286
      %288 = vmatprep.subr.mxu0 0.0
      %289 = vmatpush1.msra.mxu0 %v34
      %290 = vmatprep.subr.mxu0 0.0
      %291 = vmatpush1.msra.mxu0 %v35
      %292 = vmatprep.subr.mxu0 0.0
      %293 = vmatpush1.msra.mxu0 0.0
      %294 = vmatprep.subr.mxu0 0.0
      %295 = vmatpush1.msra.mxu0 0.0
      %296 = vmatprep.subr.mxu0 0.0
      %297 = vmatpush1.msra.mxu0 0.0
      %298 = vmatprep.subr.mxu0 0.0
      %299 = vmatpush1.msra.mxu0 0.0
      %300 = vmatprep.subr.mxu0 0.0
      %301 = vmatpush1.msra.mxu0 0.0
      %302 = vmatprep.subr.mxu0 0.0
      %303 = vmatpush1.msra.mxu0 0.0
      %304 = vmatprep.subr.mxu0 0.0
      %305 = vmatpush1.msra.mxu0 0.0
      %306 = vmatprep.subr.mxu0 0.0
      %307 = vmatpush1.msra.mxu0 0.0
      %308 = vmatprep.subr.mxu0 0.0
      %309 = vmatpush1.msra.mxu0 0.0
      %310 = vmatprep.subr.mxu0 0.0
      %311 = vmatpush1.msra.mxu0 0.0
      %312 = vmatprep.subr.mxu0 0.0
      %313 = vmatpush1.msra.mxu0 0.0
      %314 = vmatprep.subr.mxu0 0.0
      %315 = vmatpush1.msra.mxu0 0.0
      %316 = vmatprep.subr.mxu0 0.0
      %317 = vmatpush1.msra.mxu0 0.0
      %318 = vmatprep.subr.mxu0 0.0
      %319 = vmatpush1.msra.mxu0 0.0
      %320 = vmatprep.subr.mxu0 0.0
      %321 = vmatpush1.msra.mxu0 0.0
      %322 = vmatprep.subr.mxu0 0.0
      %323 = vmatpush1.msra.mxu0 0.0
      %324 = vmatprep.subr.mxu0 0.0
      %325 = vmatpush1.msra.mxu0 0.0
      %326 = vmatprep.subr.mxu0 0.0
      %327 = vmatpush1.msra.mxu0 0.0
      %328 = vmatprep.subr.mxu0 0.0
      %329 = vmatpush1.msra.mxu0 0.0
      %330 = vmatprep.subr.mxu0 0.0
      %331 = vmatpush1.msra.mxu0 0.0
      %332 = vmatprep.subr.mxu0 0.0
      %333 = vmatpush1.msra.mxu0 0.0
      %334 = vmatprep.subr.mxu0 0.0
      %335 = vmatpush1.msra.mxu0 0.0
      %336 = vmatprep.subr.mxu0 0.0
      %337 = vmatpush1.msra.mxu0 0.0
      %338 = vmatprep.subr.mxu0 0.0
      %339 = vmatpush1.msra.mxu0 0.0
      %340 = vmatprep.subr.mxu0 0.0
      %341 = vmatpush1.msra.mxu0 0.0
      %342 = vmatprep.subr.mxu0 0.0
      %343 = vmatpush1.msra.mxu0 0.0
      %344 = vmatprep.subr.mxu0 0.0
      %345 = vmatpush1.msra.mxu0 0.0
      %346 = vmatprep.subr.mxu0 0.0
      %347 = vmatpush1.msra.mxu0 0.0
      %348 = vmatprep.subr.mxu0 0.0
      %349 = vmatpush1.msra.mxu0 0.0
      %350 = vmatprep.subr.mxu0 0.0
      %351 = vmatpush1.msra.mxu0 0.0
      %352 = vmatprep.mubr.f32.mxu0 0.0
      %353 = vmatmul.mubr.f32.gmra.mrb[0].mxu0 %v54
      %v354 = vpop.f32.mrb[0].mxu0
      %v355 = vadd.f32 %v287, %v354
      %v356 = vpop.f32.mrb[0].mxu0
      %357 = vdwg.mxu0
      %v358 = vadd.f32 %v283, %v355
      %359 = vst.msk [vmem:[#allocation2] sm:$0xff] %vm131, %v358
      %s360 = scalar_lea.smem [#allocation3], 0
      %361 = sst [smem:[%s360]] 0.0
    $region29: #{tpu_custom_call.1} parent=1 // pred_fallthru
      _
    %v362 = vld [vmem:[%s1] sm:$0xff]
    %v363 = vld [vmem:[%s4] sm:$0xff]
    %v364 = vld [vmem:[%s4 + $0x8] sm:$0xff]
    %v365 = vld [vmem:[%s4 + $0x10] sm:$0xff]
    %v366 = vld [vmem:[%s4 + $0x18] sm:$0xff]
    %v367 = vld [vmem:[%s4 + $0x20] sm:$0xff]
    %v368 = vld [vmem:[%s4 + $0x28] sm:$0xff]
    %v369 = vld [vmem:[%s4 + $0x30] sm:$0xff]
    %v370 = vld [vmem:[%s4 + $0x38] sm:$0xff]
    %v371 = vld [vmem:[%s4 + $0x40] sm:$0xff]
    %v372 = vld [vmem:[%s4 + $0x48] sm:$0xff]
    %v373 = vld [vmem:[%s4 + $0x50] sm:$0xff]
    %v374 = vld [vmem:[%s4 + $0x58] sm:$0xff]
    %v375 = vld [vmem:[%s5 + $0x4] sm:$0x1]
    %v376 = vld [vmem:[%s5 + $0x5] sm:$0x1]
    %v377 = vld [vmem:[%s5 + $0x6] sm:$0x1]
    %v378 = vld [vmem:[%s5 + $0x7] sm:$0x1]
    %v379 = vlaneseq
    %v380 = vshrl.u32 %v379, 7
    %v381 = vsub.s32 0, %v380
    %v382 = vrot.slane %v375, %v381
    %vm383 = vcmask 130048
    %v385 = vsel %vm383, %v362, 0
    %387 = vmatprep.subr.mxu0 0.0
    %388 = vmatpush1.msra.mxu0 %v363
    %389 = vmatprep.subr.mxu0 0.0
    %390 = vmatpush1.msra.mxu0 %v364
    %391 = vmatprep.subr.mxu0 0.0
    %392 = vmatpush1.msra.mxu0 0.0
    %393 = vmatprep.subr.mxu0 0.0
    %394 = vmatpush1.msra.mxu0 0.0
    %395 = vmatprep.subr.mxu0 0.0
    %396 = vmatpush1.msra.mxu0 0.0
    %397 = vmatprep.subr.mxu0 0.0
    %398 = vmatpush1.msra.mxu0 0.0
    %399 = vmatprep.subr.mxu0 0.0
    %400 = vmatpush1.msra.mxu0 0.0
    %401 = vmatprep.subr.mxu0 0.0
    %402 = vmatpush1.msra.mxu0 0.0
    %403 = vmatprep.subr.mxu0 0.0
    %404 = vmatpush1.msra.mxu0 0.0
    %405 = vmatprep.subr.mxu0 0.0
    %406 = vmatpush1.msra.mxu0 0.0
    %407 = vmatprep.subr.mxu0 0.0
    %408 = vmatpush1.msra.mxu0 0.0
    %409 = vmatprep.subr.mxu0 0.0
    %410 = vmatpush1.msra.mxu0 0.0
    %411 = vmatprep.subr.mxu0 0.0
    %412 = vmatpush1.msra.mxu0 0.0
    %413 = vmatprep.subr.mxu0 0.0
    %414 = vmatpush1.msra.mxu0 0.0
    %415 = vmatprep.subr.mxu0 0.0
    %416 = vmatpush1.msra.mxu0 0.0
    %417 = vmatprep.subr.mxu0 0.0
    %418 = vmatpush1.msra.mxu0 0.0
    %419 = vmatprep.subr.mxu0 0.0
    %420 = vmatpush1.msra.mxu0 0.0
    %421 = vmatprep.subr.mxu0 0.0
    %422 = vmatpush1.msra.mxu0 0.0
    %423 = vmatprep.subr.mxu0 0.0
    %424 = vmatpush1.msra.mxu0 0.0
    %425 = vmatprep.subr.mxu0 0.0
    %426 = vmatpush1.msra.mxu0 0.0
    %427 = vmatprep.subr.mxu0 0.0
    %428 = vmatpush1.msra.mxu0 0.0
    %429 = vmatprep.subr.mxu0 0.0
    %430 = vmatpush1.msra.mxu0 0.0
    %431 = vmatprep.subr.mxu0 0.0
    %432 = vmatpush1.msra.mxu0 0.0
    %433 = vmatprep.subr.mxu0 0.0
    %434 = vmatpush1.msra.mxu0 0.0
    %435 = vmatprep.subr.mxu0 0.0
    %436 = vmatpush1.msra.mxu0 0.0
    %437 = vmatprep.subr.mxu0 0.0
    %438 = vmatpush1.msra.mxu0 0.0
    %439 = vmatprep.subr.mxu0 0.0
    %440 = vmatpush1.msra.mxu0 0.0
    %441 = vmatprep.subr.mxu0 0.0
    %442 = vmatpush1.msra.mxu0 0.0
    %443 = vmatprep.subr.mxu0 0.0
    %444 = vmatpush1.msra.mxu0 0.0
    %445 = vmatprep.subr.mxu0 0.0
    %446 = vmatpush1.msra.mxu0 0.0
    %447 = vmatprep.subr.mxu0 0.0
    %448 = vmatpush1.msra.mxu0 0.0
    %449 = vmatprep.subr.mxu0 0.0
    %450 = vmatpush1.msra.mxu0 0.0
    %451 = vmatprep.mubr.f32.mxu0 0.0
    %452 = vmatmul.mubr.f32.gmra.mrb[0].mxu0 %v385
    %v453 = vpop.f32.mrb[0].mxu0
    %v454 = vadd.f32 %v382, %v453
    %v455 = vpop.f32.mrb[0].mxu0
    %456 = vdwg.mxu0
    %v457 = vmax.f32 %v454, 0.0
    %v458 = vlaneseq
    %v459 = vshrl.u32 %v458, 7
    %v460 = vsub.s32 0, %v459
    %v461 = vrot.slane %v376, %v460
    %vm462 = vcmask 261120
    %v464 = vsel %vm462, %v457, 0
    %466 = vmatprep.subr.mxu0 0.0
    %467 = vmatpush1.msra.mxu0 %v367
    %468 = vmatprep.subr.mxu0 0.0
    %469 = vmatpush1.msra.mxu0 %v368
    %470 = vmatprep.subr.mxu0 0.0
    %471 = vmatpush1.msra.mxu0 %v369
    %472 = vmatprep.subr.mxu0 0.0
    %473 = vmatpush1.msra.mxu0 %v370
    %474 = vmatprep.subr.mxu0 0.0
    %475 = vmatpush1.msra.mxu0 0.0
    %476 = vmatprep.subr.mxu0 0.0
    %477 = vmatpush1.msra.mxu0 0.0
    %478 = vmatprep.subr.mxu0 0.0
    %479 = vmatpush1.msra.mxu0 0.0
    %480 = vmatprep.subr.mxu0 0.0
    %481 = vmatpush1.msra.mxu0 0.0
    %482 = vmatprep.subr.mxu0 0.0
    %483 = vmatpush1.msra.mxu0 0.0
    %484 = vmatprep.subr.mxu0 0.0
    %485 = vmatpush1.msra.mxu0 0.0
    %486 = vmatprep.subr.mxu0 0.0
    %487 = vmatpush1.msra.mxu0 0.0
    %488 = vmatprep.subr.mxu0 0.0
    %489 = vmatpush1.msra.mxu0 0.0
    %490 = vmatprep.subr.mxu0 0.0
    %491 = vmatpush1.msra.mxu0 0.0
    %492 = vmatprep.subr.mxu0 0.0
    %493 = vmatpush1.msra.mxu0 0.0
    %494 = vmatprep.subr.mxu0 0.0
    %495 = vmatpush1.msra.mxu0 0.0
    %496 = vmatprep.subr.mxu0 0.0
    %497 = vmatpush1.msra.mxu0 0.0
    %498 = vmatprep.subr.mxu0 0.0
    %499 = vmatpush1.msra.mxu0 0.0
    %500 = vmatprep.subr.mxu0 0.0
    %501 = vmatpush1.msra.mxu0 0.0
    %502 = vmatprep.subr.mxu0 0.0
    %503 = vmatpush1.msra.mxu0 0.0
    %504 = vmatprep.subr.mxu0 0.0
    %505 = vmatpush1.msra.mxu0 0.0
    %506 = vmatprep.subr.mxu0 0.0
    %507 = vmatpush1.msra.mxu0 0.0
    %508 = vmatprep.subr.mxu0 0.0
    %509 = vmatpush1.msra.mxu0 0.0
    %510 = vmatprep.subr.mxu0 0.0
    %511 = vmatpush1.msra.mxu0 0.0
    %512 = vmatprep.subr.mxu0 0.0
    %513 = vmatpush1.msra.mxu0 0.0
    %514 = vmatprep.subr.mxu0 0.0
    %515 = vmatpush1.msra.mxu0 0.0
    %516 = vmatprep.subr.mxu0 0.0
    %517 = vmatpush1.msra.mxu0 0.0
    %518 = vmatprep.subr.mxu0 0.0
    %519 = vmatpush1.msra.mxu0 0.0
    %520 = vmatprep.subr.mxu0 0.0
    %521 = vmatpush1.msra.mxu0 0.0
    %522 = vmatprep.subr.mxu0 0.0
    %523 = vmatpush1.msra.mxu0 0.0
    %524 = vmatprep.subr.mxu0 0.0
    %525 = vmatpush1.msra.mxu0 0.0
    %526 = vmatprep.subr.mxu0 0.0
    %527 = vmatpush1.msra.mxu0 0.0
    %528 = vmatprep.subr.mxu0 0.0
    %529 = vmatpush1.msra.mxu0 0.0
    %530 = vmatprep.mubr.f32.mxu0 0.0
    %531 = vmatmul.mubr.f32.gmra.mrb[0].mxu0 %v464
    %v532 = vpop.f32.mrb[0].mxu0
    %v533 = vadd.f32 %v461, %v532
    %v534 = vpop.f32.mrb[0].mxu0
    %535 = vdwg.mxu0
    %v536 = vmax.f32 %v533, 0.0
    %v537 = vlaneseq
    %v538 = vshrl.u32 %v537, 7
    %v539 = vsub.s32 0, %v538
    %v540 = vrot.slane %v377, %v539
    %v542 = vsel %vm462, %v536, 0
    %544 = vmatprep.subr.mxu0 0.0
    %545 = vmatpush1.msra.mxu0 %v371
    %546 = vmatprep.subr.mxu0 0.0
    %547 = vmatpush1.msra.mxu0 %v372
    %548 = vmatprep.subr.mxu0 0.0
    %549 = vmatpush1.msra.mxu0 %v373
    %550 = vmatprep.subr.mxu0 0.0
    %551 = vmatpush1.msra.mxu0 %v374
    %552 = vmatprep.subr.mxu0 0.0
    %553 = vmatpush1.msra.mxu0 0.0
    %554 = vmatprep.subr.mxu0 0.0
    %555 = vmatpush1.msra.mxu0 0.0
    %556 = vmatprep.subr.mxu0 0.0
    %557 = vmatpush1.msra.mxu0 0.0
    %558 = vmatprep.subr.mxu0 0.0
    %559 = vmatpush1.msra.mxu0 0.0
    %560 = vmatprep.subr.mxu0 0.0
    %561 = vmatpush1.msra.mxu0 0.0
    %562 = vmatprep.subr.mxu0 0.0
    %563 = vmatpush1.msra.mxu0 0.0
    %564 = vmatprep.subr.mxu0 0.0
    %565 = vmatpush1.msra.mxu0 0.0
    %566 = vmatprep.subr.mxu0 0.0
    %567 = vmatpush1.msra.mxu0 0.0
    %568 = vmatprep.subr.mxu0 0.0
    %569 = vmatpush1.msra.mxu0 0.0
    %570 = vmatprep.subr.mxu0 0.0
    %571 = vmatpush1.msra.mxu0 0.0
    %572 = vmatprep.subr.mxu0 0.0
    %573 = vmatpush1.msra.mxu0 0.0
    %574 = vmatprep.subr.mxu0 0.0
    %575 = vmatpush1.msra.mxu0 0.0
    %576 = vmatprep.subr.mxu0 0.0
    %577 = vmatpush1.msra.mxu0 0.0
    %578 = vmatprep.subr.mxu0 0.0
    %579 = vmatpush1.msra.mxu0 0.0
    %580 = vmatprep.subr.mxu0 0.0
    %581 = vmatpush1.msra.mxu0 0.0
    %582 = vmatprep.subr.mxu0 0.0
    %583 = vmatpush1.msra.mxu0 0.0
    %584 = vmatprep.subr.mxu0 0.0
    %585 = vmatpush1.msra.mxu0 0.0
    %586 = vmatprep.subr.mxu0 0.0
    %587 = vmatpush1.msra.mxu0 0.0
    %588 = vmatprep.subr.mxu0 0.0
    %589 = vmatpush1.msra.mxu0 0.0
    %590 = vmatprep.subr.mxu0 0.0
    %591 = vmatpush1.msra.mxu0 0.0
    %592 = vmatprep.subr.mxu0 0.0
    %593 = vmatpush1.msra.mxu0 0.0
    %594 = vmatprep.subr.mxu0 0.0
    %595 = vmatpush1.msra.mxu0 0.0
    %596 = vmatprep.subr.mxu0 0.0
    %597 = vmatpush1.msra.mxu0 0.0
    %598 = vmatprep.subr.mxu0 0.0
    %599 = vmatpush1.msra.mxu0 0.0
    %600 = vmatprep.subr.mxu0 0.0
    %601 = vmatpush1.msra.mxu0 0.0
    %602 = vmatprep.subr.mxu0 0.0
    %603 = vmatpush1.msra.mxu0 0.0
    %604 = vmatprep.subr.mxu0 0.0
    %605 = vmatpush1.msra.mxu0 0.0
    %606 = vmatprep.subr.mxu0 0.0
    %607 = vmatpush1.msra.mxu0 0.0
    %608 = vmatprep.mubr.f32.mxu0 0.0
    %609 = vmatmul.mubr.f32.gmra.mrb[0].mxu0 %v542
    %v610 = vpop.f32.mrb[0].mxu0
    %v611 = vadd.f32 %v540, %v610
    %v612 = vpop.f32.mrb[0].mxu0
    %613 = vdwg.mxu0
    %v614 = vmax.f32 %v611, 0.0
    %v615 = vlaneseq
    %v616 = vshrl.u32 %v615, 7
    %v617 = vsub.s32 0, %v616
    %v618 = vrot.slane %v378, %v617
    %619 = vmatprep.subr.mxu0 0.0
    %620 = vmatpush1.msra.mxu0 %v365
    %621 = vmatprep.subr.mxu0 0.0
    %622 = vmatpush1.msra.mxu0 %v366
    %623 = vmatprep.subr.mxu0 0.0
    %624 = vmatpush1.msra.mxu0 0.0
    %625 = vmatprep.subr.mxu0 0.0
    %626 = vmatpush1.msra.mxu0 0.0
    %627 = vmatprep.subr.mxu0 0.0
    %628 = vmatpush1.msra.mxu0 0.0
    %629 = vmatprep.subr.mxu0 0.0
    %630 = vmatpush1.msra.mxu0 0.0
    %631 = vmatprep.subr.mxu0 0.0
    %632 = vmatpush1.msra.mxu0 0.0
    %633 = vmatprep.subr.mxu0 0.0
    %634 = vmatpush1.msra.mxu0 0.0
    %635 = vmatprep.subr.mxu0 0.0
    %636 = vmatpush1.msra.mxu0 0.0
    %637 = vmatprep.subr.mxu0 0.0
    %638 = vmatpush1.msra.mxu0 0.0
    %639 = vmatprep.subr.mxu0 0.0
    %640 = vmatpush1.msra.mxu0 0.0
    %641 = vmatprep.subr.mxu0 0.0
    %642 = vmatpush1.msra.mxu0 0.0
    %643 = vmatprep.subr.mxu0 0.0
    %644 = vmatpush1.msra.mxu0 0.0
    %645 = vmatprep.subr.mxu0 0.0
    %646 = vmatpush1.msra.mxu0 0.0
    %647 = vmatprep.subr.mxu0 0.0
    %648 = vmatpush1.msra.mxu0 0.0
    %649 = vmatprep.subr.mxu0 0.0
    %650 = vmatpush1.msra.mxu0 0.0
    %651 = vmatprep.subr.mxu0 0.0
    %652 = vmatpush1.msra.mxu0 0.0
    %653 = vmatprep.subr.mxu0 0.0
    %654 = vmatpush1.msra.mxu0 0.0
    %655 = vmatprep.subr.mxu0 0.0
    %656 = vmatpush1.msra.mxu0 0.0
    %657 = vmatprep.subr.mxu0 0.0
    %658 = vmatpush1.msra.mxu0 0.0
    %659 = vmatprep.subr.mxu0 0.0
    %660 = vmatpush1.msra.mxu0 0.0
    %661 = vmatprep.subr.mxu0 0.0
    %662 = vmatpush1.msra.mxu0 0.0
    %663 = vmatprep.subr.mxu0 0.0
    %664 = vmatpush1.msra.mxu0 0.0
    %665 = vmatprep.subr.mxu0 0.0
    %666 = vmatpush1.msra.mxu0 0.0
    %667 = vmatprep.subr.mxu0 0.0
    %668 = vmatpush1.msra.mxu0 0.0
    %669 = vmatprep.subr.mxu0 0.0
    %670 = vmatpush1.msra.mxu0 0.0
    %671 = vmatprep.subr.mxu0 0.0
    %672 = vmatpush1.msra.mxu0 0.0
    %673 = vmatprep.subr.mxu0 0.0
    %674 = vmatpush1.msra.mxu0 0.0
    %675 = vmatprep.subr.mxu0 0.0
    %676 = vmatpush1.msra.mxu0 0.0
    %677 = vmatprep.subr.mxu0 0.0
    %678 = vmatpush1.msra.mxu0 0.0
    %679 = vmatprep.subr.mxu0 0.0
    %680 = vmatpush1.msra.mxu0 0.0
    %681 = vmatprep.subr.mxu0 0.0
    %682 = vmatpush1.msra.mxu0 0.0
    %683 = vmatprep.mubr.f32.mxu0 0.0
    %684 = vmatmul.mubr.f32.gmra.mrb[0].mxu0 %v385
    %v685 = vpop.f32.mrb[0].mxu0
    %v686 = vadd.f32 %v618, %v685
    %v687 = vpop.f32.mrb[0].mxu0
    %688 = vdwg.mxu0
    %v689 = vadd.f32 %v614, %v686
    %690 = vst.msk [vmem:[#allocation6] sm:$0xff] %vm462, %v689
    %v691 = vld [vmem:[#allocation2] sm:$0xff]
    %v693 = vsel %vm462, %v689, 0
    %v696 = vsel %vm462, %v691, 0
    %698 = vmatprep.subr.mxu0 0.0
    %699 = vmatpush1.xpose.msra.mxu0 %v696
    %700 = vmatprep.subr.mxu0 0.0
    %701 = vmatpush1.xpose.msra.mxu0 0.0
    %702 = vmatprep.subr.mxu0 0.0
    %703 = vmatpush1.xpose.msra.mxu0 0.0
    %704 = vmatprep.subr.mxu0 0.0
    %705 = vmatpush1.xpose.msra.mxu0 0.0
    %706 = vmatprep.subr.mxu0 0.0
    %707 = vmatpush1.xpose.msra.mxu0 0.0
    %708 = vmatprep.subr.mxu0 0.0
    %709 = vmatpush1.xpose.msra.mxu0 0.0
    %710 = vmatprep.subr.mxu0 0.0
    %711 = vmatpush1.xpose.msra.mxu0 0.0
    %712 = vmatprep.subr.mxu0 0.0
    %713 = vmatpush1.xpose.msra.mxu0 0.0
    %714 = vmatprep.subr.mxu0 0.0
    %715 = vmatpush1.xpose.msra.mxu0 0.0
    %716 = vmatprep.subr.mxu0 0.0
    %717 = vmatpush1.xpose.msra.mxu0 0.0
    %718 = vmatprep.subr.mxu0 0.0
    %719 = vmatpush1.xpose.msra.mxu0 0.0
    %720 = vmatprep.subr.mxu0 0.0
    %721 = vmatpush1.xpose.msra.mxu0 0.0
    %722 = vmatprep.subr.mxu0 0.0
    %723 = vmatpush1.xpose.msra.mxu0 0.0
    %724 = vmatprep.subr.mxu0 0.0
    %725 = vmatpush1.xpose.msra.mxu0 0.0
    %726 = vmatprep.subr.mxu0 0.0
    %727 = vmatpush1.xpose.msra.mxu0 0.0
    %728 = vmatprep.subr.mxu0 0.0
    %729 = vmatpush1.xpose.msra.mxu0 0.0
    %730 = vmatprep.subr.mxu0 0.0
    %731 = vmatpush1.xpose.msra.mxu0 0.0
    %732 = vmatprep.subr.mxu0 0.0
    %733 = vmatpush1.xpose.msra.mxu0 0.0
    %734 = vmatprep.subr.mxu0 0.0
    %735 = vmatpush1.xpose.msra.mxu0 0.0
    %736 = vmatprep.subr.mxu0 0.0
    %737 = vmatpush1.xpose.msra.mxu0 0.0
    %738 = vmatprep.subr.mxu0 0.0
    %739 = vmatpush1.xpose.msra.mxu0 0.0
    %740 = vmatprep.subr.mxu0 0.0
    %741 = vmatpush1.xpose.msra.mxu0 0.0
    %742 = vmatprep.subr.mxu0 0.0
    %743 = vmatpush1.xpose.msra.mxu0 0.0
    %744 = vmatprep.subr.mxu0 0.0
    %745 = vmatpush1.xpose.msra.mxu0 0.0
    %746 = vmatprep.subr.mxu0 0.0
    %747 = vmatpush1.xpose.msra.mxu0 0.0
    %748 = vmatprep.subr.mxu0 0.0
    %749 = vmatpush1.xpose.msra.mxu0 0.0
    %750 = vmatprep.subr.mxu0 0.0
    %751 = vmatpush1.xpose.msra.mxu0 0.0
    %752 = vmatprep.subr.mxu0 0.0
    %753 = vmatpush1.xpose.msra.mxu0 0.0
    %754 = vmatprep.subr.mxu0 0.0
    %755 = vmatpush1.xpose.msra.mxu0 0.0
    %756 = vmatprep.subr.mxu0 0.0
    %757 = vmatpush1.xpose.msra.mxu0 0.0
    %758 = vmatprep.subr.mxu0 0.0
    %759 = vmatpush1.xpose.msra.mxu0 0.0
    %760 = vmatprep.subr.mxu0 0.0
    %761 = vmatpush1.xpose.msra.mxu0 0.0
    %762 = vmatprep.mubr.f32.mxu0 0.0
    %763 = vmatmul.mubr.f32.gmra.mrb[0].mxu0 %v693
    %v764 = vpop.f32.mrb[0].mxu0
    %v765 = vadd.f32 0.0, %v764
    %v766 = vpop.f32.mrb[0].mxu0
    %767 = vdwg.mxu0
    %v768 = vld [vmem:[%s2] sm:$0xff]
    %v769 = vsub.f32 1.0, %v768
    %v770 = vsub.f32 0.0, %v765
    %v771 = vmax.f32 %v770, 0.0
    %v772 = vand.u32 2147483647, %v765
    %v773 = vsub.f32 0.0, %v772
    %v774 = vmul.f32 %v773, 1.442695
    %v775 = vpow.pop %v774
    %v776 = vadd.f32 %v775, 1.0
    %v777 = vlog2.pop %v776
    %v778 = vmul.f32 %v777, 0.6931472
    %v779 = vadd.f32 %v771, %v778
    %v780 = vsub.f32 0.6931472, %v779
    %v781 = vmul.f32 %v768, %v780
    %vm782 = vcmask 64512
    %v783 = vsel %vm782, %v781, 0.0
    %784 = vadd.xlane.f32.xlu0 %v783
    %v785 = vpop.xlane.xlu0 %784
    %v786 = vrot.slane %v785, 4
    %v787 = vadd.f32 %v785, %v786
    %v788 = vrot.slane %v787, 2
    %v789 = vadd.f32 %v787, %v788
    %v790 = vrot.slane %v789, 1
    %v791 = vadd.f32 %v789, %v790
    %s792 = vtos %v791
    %v793 = vadd.f32 %v779, %v765
    %v794 = vsub.f32 %v793, 0.6931472
    %v795 = vmul.f32 %v769, %v794
    %v796 = vsel %vm782, %v795, 0.0
    %797 = vadd.xlane.f32.xlu0 %v796
    %v798 = vpop.xlane.xlu0 %797
    %v799 = vrot.slane %v798, 4
    %v800 = vadd.f32 %v798, %v799
    %v801 = vrot.slane %v800, 2
    %v802 = vadd.f32 %v800, %v801
    %v803 = vrot.slane %v802, 1
    %v804 = vadd.f32 %v802, %v803
    %s805 = vtos %v804
    %s806 = sld [smem:[#allocation3]]
    %s807 = smul.f32 %s805, -4.0943334e-05
    %s808 = smul.f32 %s792, 8.167265e-05
    %s809 = ssub.f32 %s807, %s808
    %s810 = sadd.f32 %s806, %s809
    %s811 = scalar_lea.smem [#allocation3], 0
    %812 = sst [smem:[%s811]] %s810
    // Predicated region
    $region30: #{tpu_custom_call.1} parent=1 // pred_check
      _
    $region31: #{tpu_custom_call.1} parent=1 // pred_check_branch
      %814 = sbr.rel (0) target = $region33
    $region32: #{tpu_custom_call.1} parent=1 // pred_region
      %s816 = ssub.s32 16, 16
      %817 = vsyncadd [#allocation5], %s816
      %820 = dma.smem_to_hbm [#allocation3], 16, %s6, [#allocation5]
    $region33: #{tpu_custom_call.1} parent=1 // pred_fallthru
      _
    // Predicated region
    $region34: #{tpu_custom_call.1} parent=1 // pred_check
      _
    $region35: #{tpu_custom_call.1} parent=1 // pred_check_branch
      %822 = sbr.rel (0) target = $region37
    $region36: #{tpu_custom_call.1} parent=1 // pred_region
      %s824 = ssub.s32 128, 128
      %825 = vsyncadd [#allocation4], %s824
      %s827 = sshll.u32 [#allocation6], 4
      %s828 = int_to_ptr.vmem [resolvable:$true] %s827
      %830 = dma.vmem_to_hbm [thread:$0]  %s828, 128, %s7, [#allocation4]
    $region37: #{tpu_custom_call.1} parent=1 // pred_fallthru
      _
    // Predicated region
    $region38: #{tpu_custom_call.1} parent=1 // pred_check
      _
    $region39: #{tpu_custom_call.1} parent=1 // pred_check_branch
      %832 = sbr.rel (0) target = $region41
    $region40: #{tpu_custom_call.1} parent=1 // pred_region
      %833 = dma.done [#allocation5], 16
    $region41: #{tpu_custom_call.1} parent=1 // pred_fallthru
      _
    // Predicated region
    $region42: #{tpu_custom_call.1} parent=1 // pred_check
      _
    $region43: #{tpu_custom_call.1} parent=1 // pred_check_branch
      %835 = sbr.rel (0) target = $region45
    $region44: #{tpu_custom_call.1} parent=1 // pred_region
      %836 = dma.done [#allocation4], 128
    $region45: #{tpu_custom_call.1} parent=1 // pred_fallthru
      _
    %837 = sfence
    %838 = vsyncpa [#allocation4], 1
    %839 = vsyncpa [#allocation5], 1

</llo_original>
